<compile_context>
chip_gen: v6e
topology: v6e:2x2x1
jax: 0.10.0
libtpu: 0.0.40
codegen_flags: <defaults>
</compile_context>

<pallas_src>
import functools

import jax
import jax.numpy as jnp
from jax.experimental import pallas as pl
from jax.experimental.pallas import tpu as pltpu

EPS = 1e-5  # torch nn.LayerNorm default


def _round_up(x, m):
    return (x + m - 1) // m * m


def _vmem_capacity_bytes():
    try:
        cap = getattr(pltpu.get_tpu_info(), "vmem_capacity_bytes", None)
        if cap:
            return int(cap)
    except Exception:
        pass
    return 128 * 1024 * 1024  # v5e / v6e default


def prenorm_linear_kernel(x_ref, g_ref, b_ref, w_ref, wb_ref, o_ref, y_ref):
    """One (token tile i, output tile j) step of LayerNorm(x) @ W + b.

    x_ref : (tm, D)   token tile (activation dtype)
    g_ref : (1, D)    LayerNorm gamma, f32
    b_ref : (1, D)    LayerNorm beta,  f32
    w_ref : (D, tn)   Linear weight block, MXU dtype
    wb_ref: (1, tn)   Linear bias block, f32
    o_ref : (tm, tn)  output tile
    y_ref : (tm, D)   VMEM scratch: normalized activations (MXU dtype)
    """
    # Normalize once per token tile (j == 0) and cache for all output blocks.
    @pl.when(pl.program_id(1) == 0)
    def _():
        x = x_ref[...].astype(jnp.float32)
        inv_d = 1.0 / x.shape[-1]
        # Two-pass statistics (no E[x^2]-mean^2 cancellation), all in f32.
        mean = jnp.sum(x, axis=-1, keepdims=True) * inv_d
        xc = x - mean
        var = jnp.sum(xc * xc, axis=-1, keepdims=True) * inv_d
        y = xc * jax.lax.rsqrt(var + EPS)
        y = y * g_ref[...].astype(jnp.float32) + b_ref[...].astype(jnp.float32)
        y_ref[...] = y.astype(y_ref.dtype)

    # MXU matmul with f32 accumulation.
    out = jnp.dot(y_ref[...], w_ref[...], preferred_element_type=jnp.float32)
    out = out + wb_ref[...].astype(jnp.float32)
    o_ref[...] = out.astype(o_ref.dtype)


@functools.partial(jax.jit, static_argnames=("tm", "mxu_dtype"))
def prenorm_linear(x, gamma, beta, w, wb, *, tm=None, mxu_dtype=jnp.bfloat16):
    """x: [B, N, D] -> [B, N, Dout].  LayerNorm over D, then Linear(D, Dout)."""
    B, N, D = x.shape
    Dout = w.shape[1]
    M = B * N
    x2 = x.reshape(M, D)

    xb = jnp.dtype(x.dtype).itemsize
    ob = xb                                   # output in the activation dtype
    mb = jnp.dtype(mxu_dtype).itemsize

    w_c = w.astype(mxu_dtype)                 # bf16 halves the W DMA (default)
    g2 = gamma.reshape(1, D).astype(jnp.float32)
    b2 = beta.reshape(1, D).astype(jnp.float32)
    wb2 = wb.reshape(1, Dout).astype(jnp.float32)

    # ---- Generation-aware tiling -------------------------------------------
    vmem_cap = _vmem_capacity_bytes()
    big_vmem = vmem_cap >= (96 << 20)         # v5e/v6e: 128 MiB, v7x: 64 MiB
    tm_req = tm if tm is not None else (512 if big_vmem else 256)
    tn_cap = 2048 if big_vmem else 1024       # multiple of 128

    # Output tiling: single full-width block when it fits, else stream W as
    # (D, tn) blocks (tn a multiple of 128; a partial last block is masked).
    tn = Dout if Dout <= tn_cap else tn_cap

    # Token tile: clamp to problem size; guarantee >= 2 grid steps so the
    # "parallel" axis can span both TensorCores on v7x.
    tm_eff = max(8, min(tm_req, _round_up(M, 8)))
    if M > 8:
        tm_eff = min(tm_eff, _round_up(-(-M // 2), 8))

    def est(tm_, tn_):
        n_n_ = pl.cdiv(Dout, tn_)
        w_bufs = 1 if n_n_ == 1 else 2        # Buffered(1) when W is constant
        return (2 * tm_ * D * xb              # x tile (double buffered)
                + tm_ * D * mb                # normalized-activation scratch
                + w_bufs * D * tn_ * mb       # W block(s)
                + 2 * tm_ * tn_ * ob          # out tile (double buffered)
                + 2 * D * 4 + w_bufs * tn_ * 4)  # gamma / beta / wb

    # Shrink the working set (never just the limit) until it fits.
    budget = int(vmem_cap * 0.85)
    while est(tm_eff, tn) > budget and tm_eff > 8:
        tm_eff = max(8, tm_eff // 2)
    while est(tm_eff, tn) > budget and tn > 128:
        tn = max(128, _round_up(tn // 2, 128))

    n_m = pl.cdiv(M, tm_eff)
    n_n = pl.cdiv(Dout, tn)
    const_w = n_n == 1

    vmem_est = est(tm_eff, tn)
    vmem_limit = min(max(vmem_est + (4 << 20), 32 << 20), int(vmem_cap * 0.9))
    vmem_limit = max(vmem_limit, vmem_est)    # never cap below actual demand

    cost = pl.CostEstimate(
        flops=2 * M * D * Dout + 8 * M * D,
        transcendentals=M,                    # one rsqrt per token row
        bytes_accessed=(M * D * xb            # x in
                        + D * Dout * mb       # W in
                        + (2 * D + Dout) * 4  # gamma / beta / wb in
                        + M * Dout * ob),     # out
    )

    if const_w:
        w_spec = pl.BlockSpec((D, tn), lambda i, j: (0, j),
                              pipeline_mode=pl.Buffered(1))
        wb_spec = pl.BlockSpec((1, tn), lambda i, j: (0, j),
                               pipeline_mode=pl.Buffered(1))
    else:
        w_spec = pl.BlockSpec((D, tn), lambda i, j: (0, j))
        wb_spec = pl.BlockSpec((1, tn), lambda i, j: (0, j))

    out2 = pl.pallas_call(
        prenorm_linear_kernel,
        out_shape=jax.ShapeDtypeStruct((M, Dout), x.dtype),
        grid_spec=pltpu.PrefetchScalarGridSpec(
            num_scalar_prefetch=0,
            grid=(n_m, n_n),
            in_specs=[
                pl.BlockSpec((tm_eff, D), lambda i, j: (i, 0)),      # x tile
                pl.BlockSpec((1, D), lambda i, j: (0, 0),
                             pipeline_mode=pl.Buffered(1)),          # gamma
                pl.BlockSpec((1, D), lambda i, j: (0, 0),
                             pipeline_mode=pl.Buffered(1)),          # beta
                w_spec,                                              # W
                wb_spec,                                             # W bias
            ],
            out_specs=pl.BlockSpec((tm_eff, tn), lambda i, j: (i, j)),
            scratch_shapes=[pltpu.VMEM((tm_eff, D), mxu_dtype)],
        ),
        compiler_params=pltpu.CompilerParams(
            # j carries the cached normalized activations -> "arbitrary".
            dimension_semantics=("parallel", "arbitrary"),
            vmem_limit_bytes=int(vmem_limit)),
        cost_estimate=cost,
    )(x2, g2, b2, w_c, wb2)

    return out2.reshape(B, N, Dout)


def reference(x, gamma, beta, w, wb):
    """Exact f32 PreNorm(dim, Linear(dim, dim)) forward (torch semantics)."""
    xf = x.astype(jnp.float32)
    mean = jnp.mean(xf, axis=-1, keepdims=True)
    var = jnp.mean((xf - mean) ** 2, axis=-1, keepdims=True)
    y = (xf - mean) / jnp.sqrt(var + EPS) * gamma + beta
    out = jnp.dot(y, w.astype(jnp.float32),
                  precision=jax.lax.Precision.HIGHEST) + wb
    return out.astype(x.dtype)


if __name__ == "__main__":
    key = jax.random.PRNGKey(0)
    B, N, D = 2, 8, 32      # batch, tokens, dim
    Dout = D                # fn = Linear(dim, dim)

    kx, kw, kb, kg, kbt = jax.random.split(key, 5)
    x = jax.random.normal(kx, (B, N, D), dtype=jnp.float32)

    gamma = 1.0 + 0.1 * jax.random.normal(kg, (D,), dtype=jnp.float32)
    beta = 0.1 * jax.random.normal(kbt, (D,), dtype=jnp.float32)
    w = jax.random.normal(kw, (D, Dout), dtype=jnp.float32) * 0.02
    wb = jax.random.normal(kb, (Dout,), dtype=jnp.float32) * 0.02

    ref = reference(x, gamma, beta, w, wb)

    # Strict check: f32 MXU path against the true f32 PreNorm + Linear.
    out_f32 = prenorm_linear(x, gamma, beta, w, wb, mxu_dtype=jnp.float32)
    jax.block_until_ready(out_f32)
    assert out_f32.shape == (B, N, Dout)
    assert jnp.allclose(out_f32, ref, atol=1e-3, rtol=1e-3), (
        float(jnp.max(jnp.abs(out_f32 - ref))))

    # Default production path: bf16 MXU operands, f32 accumulation / stats.
    out_bf = prenorm_linear(x, gamma, beta, w, wb)
    jax.block_until_ready(out_bf)
    assert out_bf.shape == (B, N, Dout)
    assert jnp.allclose(out_bf, ref, atol=1e-2, rtol=5e-2), (
        float(jnp.max(jnp.abs(out_bf - ref))))

    print("KERNEL_OK")
</pallas_src>

<mosaic_0001>
module attributes {stable_mosaic.version = 11 : i64} {
  func.func @prenorm_linear_kernel(%arg0: i32, %arg1: i32, %arg2: memref<8x32xf32, #tpu.memory_space<vmem>>, %arg3: memref<1x32xf32, #tpu.memory_space<vmem>>, %arg4: memref<1x32xf32, #tpu.memory_space<vmem>>, %arg5: memref<32x32xf32, #tpu.memory_space<vmem>>, %arg6: memref<1x32xf32, #tpu.memory_space<vmem>>, %arg7: memref<8x32xf32, #tpu.memory_space<vmem>>, %arg8: memref<8x32xf32, #tpu.memory_space<vmem>>) attributes {dimension_semantics = [#tpu.dimension_semantics<parallel>, #tpu.dimension_semantics<arbitrary>], iteration_bounds = array<i64: 2, 1>, scalar_prefetch = 0 : i64, scratch_operands = 1 : i64, tpu.core_type = #tpu.core_type<tc>, window_params = [{transform_indices = @transform_0, window_bounds = array<i64: 8, 32>}, {pipeline_mode = #tpu.pipeline_mode<synchronous>, transform_indices = @transform_1, window_bounds = array<i64: 1, 32>}, {pipeline_mode = #tpu.pipeline_mode<synchronous>, transform_indices = @transform_2, window_bounds = array<i64: 1, 32>}, {pipeline_mode = #tpu.pipeline_mode<synchronous>, transform_indices = @transform_3, window_bounds = array<i64: 32, 32>}, {pipeline_mode = #tpu.pipeline_mode<synchronous>, transform_indices = @transform_4, window_bounds = array<i64: 1, 32>}, {transform_indices = @transform_5, window_bounds = array<i64: 8, 32>}]} {
    %c0_i32 = arith.constant 0 : i32
    %0 = arith.cmpi eq, %arg1, %c0_i32 : i32
    %1 = arith.extui %0 : i1 to i32
    %c0_i32_0 = arith.constant 0 : i32
    %2 = arith.cmpi ne, %1, %c0_i32_0 : i32
    scf.if %2 {
      %c0_8 = arith.constant 0 : index
      %c0_9 = arith.constant 0 : index
      %10 = vector.load %arg2[%c0_8, %c0_9] : memref<8x32xf32, #tpu.memory_space<vmem>>, vector<8x32xf32>
      %cst_10 = arith.constant dense<0.000000e+00> : vector<8xf32>
      %11 = vector.multi_reduction <add>, %10, %cst_10 [1] : vector<8x32xf32> to vector<8xf32>
      %12 = vector.shape_cast %11 : vector<8xf32> to vector<8x1xf32>
      %cst_11 = arith.constant 3.125000e-02 : f32
      %13 = vector.broadcast %cst_11 : f32 to vector<8x1xf32>
      %14 = arith.mulf %12, %13 : vector<8x1xf32>
      %15 = vector.broadcast %14 : vector<8x1xf32> to vector<8x32xf32>
      %16 = arith.subf %10, %15 : vector<8x32xf32>
      %17 = arith.mulf %16, %16 : vector<8x32xf32>
      %cst_12 = arith.constant dense<0.000000e+00> : vector<8xf32>
      %18 = vector.multi_reduction <add>, %17, %cst_12 [1] : vector<8x32xf32> to vector<8xf32>
      %19 = vector.shape_cast %18 : vector<8xf32> to vector<8x1xf32>
      %cst_13 = arith.constant 3.125000e-02 : f32
      %20 = vector.broadcast %cst_13 : f32 to vector<8x1xf32>
      %21 = arith.mulf %19, %20 : vector<8x1xf32>
      %cst_14 = arith.constant 9.99999974E-6 : f32
      %22 = vector.broadcast %cst_14 : f32 to vector<8x1xf32>
      %23 = arith.addf %21, %22 : vector<8x1xf32>
      %24 = math.rsqrt %23 : vector<8x1xf32>
      %25 = vector.broadcast %24 : vector<8x1xf32> to vector<8x32xf32>
      %26 = arith.mulf %16, %25 : vector<8x32xf32>
      %c0_15 = arith.constant 0 : index
      %c0_16 = arith.constant 0 : index
      %27 = vector.load %arg3[%c0_15, %c0_16] : memref<1x32xf32, #tpu.memory_space<vmem>>, vector<1x32xf32>
      %28 = vector.broadcast %27 : vector<1x32xf32> to vector<8x32xf32>
      %29 = arith.mulf %26, %28 : vector<8x32xf32>
      %c0_17 = arith.constant 0 : index
      %c0_18 = arith.constant 0 : index
      %30 = vector.load %arg4[%c0_17, %c0_18] : memref<1x32xf32, #tpu.memory_space<vmem>>, vector<1x32xf32>
      %31 = vector.broadcast %30 : vector<1x32xf32> to vector<8x32xf32>
      %32 = arith.addf %29, %31 : vector<8x32xf32>
      %c0_19 = arith.constant 0 : index
      %c0_20 = arith.constant 0 : index
      %33 = vector.load %arg8[%c0_19, %c0_20] : memref<8x32xf32, #tpu.memory_space<vmem>>, vector<8x32xf32>
      tpu.vector_store %arg8[%c0_19, %c0_20], %32 {strides = array<i32>} : memref<8x32xf32, #tpu.memory_space<vmem>>, vector<8x32xf32>,
    } else {
    }
    %c0 = arith.constant 0 : index
    %c0_1 = arith.constant 0 : index
    %3 = vector.load %arg8[%c0, %c0_1] : memref<8x32xf32, #tpu.memory_space<vmem>>, vector<8x32xf32>
    %c0_2 = arith.constant 0 : index
    %c0_3 = arith.constant 0 : index
    %4 = vector.load %arg5[%c0_2, %c0_3] : memref<32x32xf32, #tpu.memory_space<vmem>>, vector<32x32xf32>
    %cst = arith.constant dense<0.000000e+00> : vector<8x32xf32>
    %5 = tpu.matmul %3, %4, %cst {dimension_numbers = #tpu.dot_dimension_numbers<[1], [0], [0], [1], [0, 0, 1, 1], [], []>} : vector<8x32xf32>, vector<32x32xf32>, vector<8x32xf32> -> vector<8x32xf32>
    %c0_4 = arith.constant 0 : index
    %c0_5 = arith.constant 0 : index
    %6 = vector.load %arg6[%c0_4, %c0_5] : memref<1x32xf32, #tpu.memory_space<vmem>>, vector<1x32xf32>
    %7 = vector.broadcast %6 : vector<1x32xf32> to vector<8x32xf32>
    %8 = arith.addf %5, %7 : vector<8x32xf32>
    %c0_6 = arith.constant 0 : index
    %c0_7 = arith.constant 0 : index
    %9 = vector.load %arg7[%c0_6, %c0_7] : memref<8x32xf32, #tpu.memory_space<vmem>>, vector<8x32xf32>
    tpu.vector_store %arg7[%c0_6, %c0_7], %8 {strides = array<i32>} : memref<8x32xf32, #tpu.memory_space<vmem>>, vector<8x32xf32>,
    return
  }
  func.func @transform_0(%arg0: i32, %arg1: i32) -> (i32, i32) {
    %c0_i32 = arith.constant 0 : i32
    %c0_i32_0 = arith.constant 0 : i32
    return %arg0, %c0_i32 : i32, i32
  }
  func.func @transform_1(%arg0: i32, %arg1: i32) -> (i32, i32) {
    %c0_i32 = arith.constant 0 : i32
    %c0_i32_0 = arith.constant 0 : i32
    %c0_i32_1 = arith.constant 0 : i32
    return %c0_i32, %c0_i32_0 : i32, i32
  }
  func.func @transform_2(%arg0: i32, %arg1: i32) -> (i32, i32) {
    %c0_i32 = arith.constant 0 : i32
    %c0_i32_0 = arith.constant 0 : i32
    %c0_i32_1 = arith.constant 0 : i32
    return %c0_i32, %c0_i32_0 : i32, i32
  }
  func.func @transform_3(%arg0: i32, %arg1: i32) -> (i32, i32) {
    %c0_i32 = arith.constant 0 : i32
    %c0_i32_0 = arith.constant 0 : i32
    return %c0_i32, %arg1 : i32, i32
  }
  func.func @transform_4(%arg0: i32, %arg1: i32) -> (i32, i32) {
    %c0_i32 = arith.constant 0 : i32
    %c0_i32_0 = arith.constant 0 : i32
    return %c0_i32, %arg1 : i32, i32
  }
  func.func @transform_5(%arg0: i32, %arg1: i32) -> (i32, i32) {
    %c0_i32 = arith.constant 0 : i32
    return %arg0, %arg1 : i32, i32
  }
}

</mosaic_0001>

<llo_original>
// kernel: prenorm_linear.1
$region0: #{prenorm_linear.1}
  #allocation0 [shape = 'u32[]', space=smem, size = 0x4, offset = 0x4, fixed_abs, tag = 'smem constant byte address 0x4 - core index']
  #allocation1 [shape = 'u32[144,128]{1,0:T(1,128)}', space=vmem, size = 0x12000, scoped, tag = 'internal scratch']
  #allocation2 [shape = 'f32[8,32]{1,0:T(8,128)}', space=vmem, size = 0x1000, scoped, tag = 'scratch operand']
  %s0 = inlined_call_operand.hbm [shape: f32[16,32], index: 0, kind: input, shape index: {}]
  %s1 = inlined_call_operand.vmem [shape: f32[1,32], index: 1, kind: input, shape index: {}]
  %s2 = inlined_call_operand.vmem [shape: f32[1,32], index: 2, kind: input, shape index: {}]
  %s3 = inlined_call_operand.hbm [shape: f32[32,32], index: 3, kind: input, shape index: {}]
  %s4 = inlined_call_operand.vmem [shape: f32[1,32], index: 4, kind: input, shape index: {}]
  %s5 = inlined_call_operand.hbm [shape: f32[16,32], index: 5, kind: output, shape index: {}]
  %s6 = sld [smem:[#allocation0]]
  $region65: #{prenorm_linear.1} parent=0
    _
  %s8 = ssub.s32 1, %s6
  %s9 = scalar_select 0, %s8, %s6
  $region1: #{prenorm_linear.1} parent=0
    #allocation3 [shape = 'u8[8192]{0}', space=vmem, size = 0x2000, scoped, tag = 'input window, operand 0']
    #allocation4 [shape = 's32[2]{0}', space=sflag, size = 0x8, scoped, tag = 'scoped memory for prenorm_linear.1']
    #allocation5 [shape = 's32[2]{0}', space=sflag, size = 0x8, scoped, tag = 'scoped memory for prenorm_linear.1']
    #allocation6 [shape = 'u8[16384]{0}', space=vmem, size = 0x4000, scoped, tag = 'input window, operand 3, single buffered']
    #allocation7 [shape = 's32[1]{0}', space=sflag, size = 0x4, scoped, tag = 'scoped memory for prenorm_linear.1']
    #allocation8 [shape = 'u8[8192]{0}', space=vmem, size = 0x2000, scoped, tag = 'output window, operand 0']
    %10 = vsyncpa [#allocation4], 0
    %s11 = scalar_lea.sflag [#allocation4], 1
    %12 = vsyncpa %s11, 0
    %13 = vsyncpa [#allocation7], 0
    %14 = vsyncpa [#allocation5], 0
    %s15 = scalar_lea.sflag [#allocation5], 1
    %16 = vsyncpa %s15, 0
    loop: start=0, step=1, limit=4
    $region2: #{prenorm_linear.1} parent=1 // loop_pre_header
      _
    $region3: #{prenorm_linear.1} parent=1 // loop_header
      %s18 = sphi 0, %s22
      %p19 = scmp.ge.s32.totalorder %s18, 4
      %s25 = sphi 0, %s37
      %s26 = sphi 0, %s33
      %s27 = sphi 0, %s25
      %s28 = sphi 0, %s26
      %s29 = sphi 0, %s27
      %s30 = sphi 0, %s28
      %s40 = sphi 0, %s42
      %s43 = sphi 0, %s40
      %s44 = sphi 0, %s43
      %s60 = sphi 0, %s44
      %s64 = sphi 0, %s64
      %s66 = sphi 0, %s64
      %s67 = sphi 0, %s66
      %s81 = sphi 0, %s67
      %s85 = sphi 0, %s85
      %s87 = sphi 0, %s85
      %s88 = sphi 0, %s87
      %s102 = sphi 0, %s88
      %s108 = sphi 0, %s110
      %s111 = sphi 0, %s108
      %s112 = sphi 0, %s111
      %s128 = sphi 0, %s112
      %s134 = sphi 0, %s136
      %s137 = sphi 0, %s134
      %s138 = sphi 0, %s137
      %s154 = sphi 0, %s138
      %s162 = sphi 0, %s164
      %s165 = sphi 0, %s162
      %s166 = sphi 0, %s165
      %s182 = sphi 0, %s166
    $region4: #{prenorm_linear.1} parent=1 // loop_header_branch
      %21 = sbr.rel (%p19) target = $region8
    $region5: #{prenorm_linear.1} parent=1 // loop_body
      %s23 = ssub.s32 %s18, 1
      %s24 = ssub.s32 %s18, 2
      %s31 = sadd.s32 1, %s26
      %p32 = scmp.ge.s32.totalorder %s31, 1
      %s33 = scalar_select %p32, 0, %s31
      %s34 = sadd.s32 1, %s25
      %s35 = scalar_select %p32, %s34, %s25
      %p36 = scmp.ge.s32.totalorder %s35, 2
      %s37 = scalar_select %p36, 0, %s35
      %s38 = ssub.s32 %s25, %s37
      %p39 = scmp.eq.s32.totalorder %s38, 0
      %s41 = sadd.s32 %s40, 1
      %s42 = scalar_select %p39, %s40, %s41
      %p45 = pneg %p39
      %p46 = scmp.eq.s32.totalorder %s18, 1
      %p47 = por %p45, %p46
      %p48 = scmp.ne.s32.totalorder %s40, %s43
      %p49 = scmp.eq.s32.totalorder %s18, 0
      %p50 = por %p48, %p49
      %p51 = scmp.ne.s32.totalorder %s40, %s43
      %p52 = scmp.eq.s32.totalorder %s23, 1
      %p53 = por %p51, %p52
      %p54 = scmp.ne.s32.totalorder %s43, %s44
      %p55 = scmp.eq.s32.totalorder %s23, 0
      %p56 = por %p54, %p55
      %p57 = scmp.ne.s32.totalorder %s43, %s44
      %p58 = scmp.eq.s32.totalorder %s24, 1
      %p59 = por %p57, %p58
      %p61 = scmp.ne.s32.totalorder %s44, %s60
      %p62 = scmp.eq.s32.totalorder %s24, 0
      %p63 = por %p61, %p62
      %s65 = sadd.s32 %s64, 1
      %p68 = scmp.eq.s32.totalorder %s18, 1
      %p69 = scmp.ne.s32.totalorder %s64, %s66
      %p70 = scmp.eq.s32.totalorder %s18, 0
      %p71 = por %p69, %p70
      %p72 = scmp.ne.s32.totalorder %s64, %s66
      %p73 = scmp.eq.s32.totalorder %s23, 1
      %p74 = por %p72, %p73
      %p75 = scmp.ne.s32.totalorder %s66, %s67
      %p76 = scmp.eq.s32.totalorder %s23, 0
      %p77 = por %p75, %p76
      %p78 = scmp.ne.s32.totalorder %s66, %s67
      %p79 = scmp.eq.s32.totalorder %s24, 1
      %p80 = por %p78, %p79
      %p82 = scmp.ne.s32.totalorder %s67, %s81
      %p83 = scmp.eq.s32.totalorder %s24, 0
      %p84 = por %p82, %p83
      %s86 = sadd.s32 %s85, 1
      %p89 = scmp.eq.s32.totalorder %s18, 1
      %p90 = scmp.ne.s32.totalorder %s85, %s87
      %p91 = scmp.eq.s32.totalorder %s18, 0
      %p92 = por %p90, %p91
      %p93 = scmp.ne.s32.totalorder %s85, %s87
      %p94 = scmp.eq.s32.totalorder %s23, 1
      %p95 = por %p93, %p94
      %p96 = scmp.ne.s32.totalorder %s87, %s88
      %p97 = scmp.eq.s32.totalorder %s23, 0
      %p98 = por %p96, %p97
      %p99 = scmp.ne.s32.totalorder %s87, %s88
      %p100 = scmp.eq.s32.totalorder %s24, 1
      %p101 = por %p99, %p100
      %p103 = scmp.ne.s32.totalorder %s88, %s102
      %p104 = scmp.eq.s32.totalorder %s24, 0
      %p105 = por %p103, %p104
      %s106 = ssub.s32 %s26, %s33
      %p107 = scmp.eq.s32.totalorder %s106, 0
      %s109 = sadd.s32 %s108, 1
      %s110 = scalar_select %p107, %s108, %s109
      %p113 = pneg %p107
      %p114 = scmp.eq.s32.totalorder %s18, 1
      %p115 = por %p113, %p114
      %p116 = scmp.ne.s32.totalorder %s108, %s111
      %p117 = scmp.eq.s32.totalorder %s18, 0
      %p118 = por %p116, %p117
      %p119 = scmp.ne.s32.totalorder %s108, %s111
      %p120 = scmp.eq.s32.totalorder %s23, 1
      %p121 = por %p119, %p120
      %p122 = scmp.ne.s32.totalorder %s111, %s112
      %p123 = scmp.eq.s32.totalorder %s23, 0
      %p124 = por %p122, %p123
      %p125 = scmp.ne.s32.totalorder %s111, %s112
      %p126 = scmp.eq.s32.totalorder %s24, 1
      %p127 = por %p125, %p126
      %p129 = scmp.ne.s32.totalorder %s112, %s128
      %p130 = scmp.eq.s32.totalorder %s24, 0
      %p131 = por %p129, %p130
      %s132 = ssub.s32 %s26, %s33
      %p133 = scmp.eq.s32.totalorder %s132, 0
      %s135 = sadd.s32 %s134, 1
      %s136 = scalar_select %p133, %s134, %s135
      %p139 = pneg %p133
      %p140 = scmp.eq.s32.totalorder %s18, 1
      %p141 = por %p139, %p140
      %p142 = scmp.ne.s32.totalorder %s134, %s137
      %p143 = scmp.eq.s32.totalorder %s18, 0
      %p144 = por %p142, %p143
      %p145 = scmp.ne.s32.totalorder %s134, %s137
      %p146 = scmp.eq.s32.totalorder %s23, 1
      %p147 = por %p145, %p146
      %p148 = scmp.ne.s32.totalorder %s137, %s138
      %p149 = scmp.eq.s32.totalorder %s23, 0
      %p150 = por %p148, %p149
      %p151 = scmp.ne.s32.totalorder %s137, %s138
      %p152 = scmp.eq.s32.totalorder %s24, 1
      %p153 = por %p151, %p152
      %p155 = scmp.ne.s32.totalorder %s138, %s154
      %p156 = scmp.eq.s32.totalorder %s24, 0
      %p157 = por %p155, %p156
      %s158 = ssub.s32 %s25, %s37
      %s159 = ssub.s32 %s26, %s33
      %s160 = sor.u32 %s158, %s159
      %p161 = scmp.eq.s32.totalorder %s160, 0
      %s163 = sadd.s32 %s162, 1
      %s164 = scalar_select %p161, %s162, %s163
      %p167 = pneg %p161
      %p168 = scmp.eq.s32.totalorder %s18, 1
      %p169 = por %p167, %p168
      %p170 = scmp.ne.s32.totalorder %s162, %s165
      %p171 = scmp.eq.s32.totalorder %s18, 0
      %p172 = por %p170, %p171
      %p173 = scmp.ne.s32.totalorder %s162, %s165
      %p174 = scmp.eq.s32.totalorder %s23, 1
      %p175 = por %p173, %p174
      %p176 = scmp.ne.s32.totalorder %s165, %s166
      %p177 = scmp.eq.s32.totalorder %s23, 0
      %p178 = por %p176, %p177
      %p179 = scmp.ne.s32.totalorder %s165, %s166
      %p180 = scmp.eq.s32.totalorder %s24, 1
      %p181 = por %p179, %p180
      %p183 = scmp.ne.s32.totalorder %s166, %s182
      %p184 = scmp.eq.s32.totalorder %s24, 0
      %p185 = por %p183, %p184
      %p186 = scmp.le.s32.totalorder 1, %s18
      %p187 = scmp.lt.s32.totalorder %s18, 3
      %p188 = pnand %p186, %p187
      %p189 = pneg %p188
      // Predicated region
      $region9: #{prenorm_linear.1} parent=5 // pred_check
        _
      $region10: #{prenorm_linear.1} parent=5 // pred_check_branch
        %191 = sbr.rel (%p188) target = $region12
      $region11: #{prenorm_linear.1} parent=5 // pred_region
        %s192 = ssub.s32 %s18, 1
        // Predicated region
        $region13: #{prenorm_linear.1} parent=11 // pred_check
          %p193 = pneg %p77
        $region14: #{prenorm_linear.1} parent=11 // pred_check_branch
          %195 = sbr.rel (%p193) target = $region16
        $region15: #{prenorm_linear.1} parent=11 // pred_region
          _
        $region16: #{prenorm_linear.1} parent=11 // pred_fallthru
          _
        // Predicated region
        $region17: #{prenorm_linear.1} parent=11 // pred_check
          %p196 = pneg %p98
        $region18: #{prenorm_linear.1} parent=11 // pred_check_branch
          %198 = sbr.rel (%p196) target = $region20
        $region19: #{prenorm_linear.1} parent=11 // pred_region
          _
        $region20: #{prenorm_linear.1} parent=11 // pred_fallthru
          _
        // Predicated region
        $region21: #{prenorm_linear.1} parent=11 // pred_check
          %p199 = pneg %p124
        $region22: #{prenorm_linear.1} parent=11 // pred_check_branch
          %201 = sbr.rel (%p199) target = $region24
        $region23: #{prenorm_linear.1} parent=11 // pred_region
          %s203 = ssub.s32 512, 512
          %204 = vsyncadd [#allocation7], %s203
          %s205 = smul.addr %s28, 128
          %s206 = scalar_lea.hbm %s3, %s205
          %s207 = sshll.u32 [#allocation6], 4
          %s208 = int_to_ptr.vmem [resolvable:$true] %s207
          %213 = dma.hbm_to_vmem [thread:$0]  %s206, 512, %s208, [#allocation7], 128, 128, 8
        $region24: #{prenorm_linear.1} parent=11 // pred_fallthru
          _
        // Predicated region
        $region25: #{prenorm_linear.1} parent=11 // pred_check
          %p214 = pneg %p150
        $region26: #{prenorm_linear.1} parent=11 // pred_check_branch
          %216 = sbr.rel (%p214) target = $region28
        $region27: #{prenorm_linear.1} parent=11 // pred_region
          %p217 = scmp.lt.s32.totalorder %s28, 0
          %s218 = scalar_select %p217, %s28, 0
          %s219 = scalar_lea.vmem %s4, %s218
        $region28: #{prenorm_linear.1} parent=11 // pred_fallthru
          _
      $region12: #{prenorm_linear.1} parent=5 // pred_fallthru
        _
      %p220 = scmp.lt.s32.totalorder %s18, 2
      // Predicated region
      $region29: #{prenorm_linear.1} parent=5 // pred_check
        %p221 = pneg %p220
      $region30: #{prenorm_linear.1} parent=5 // pred_check_branch
        %223 = sbr.rel (%p221) target = $region32
      $region31: #{prenorm_linear.1} parent=5 // pred_region
        // Predicated region
        $region33: #{prenorm_linear.1} parent=31 // pred_check
          %p224 = pneg %p50
        $region34: #{prenorm_linear.1} parent=31 // pred_check_branch
          %226 = sbr.rel (%p224) target = $region36
        $region35: #{prenorm_linear.1} parent=31 // pred_region
          %s227 = sand.u32 %s40, 1
          %s228 = scalar_lea.sflag [#allocation4], %s227
          %s229 = sand.u32 %s40, 1
          %s230 = smul.addr %s229, 8
          %s231 = scalar_lea.vmem [#allocation3], %s230
          %s233 = ssub.s32 128, 128
          %234 = vsyncadd %s228, %s233
          %s235 = smul.addr %s25, 128
          %s236 = scalar_lea.hbm %s0, %s235
          %s238 = sshll.u32 %s231, 4
          %s239 = int_to_ptr.vmem [resolvable:$true] %s238
          %241 = dma.hbm_to_vmem [thread:$0]  %s236, 128, %s239, %s228
        $region36: #{prenorm_linear.1} parent=31 // pred_fallthru
          _
      $region32: #{prenorm_linear.1} parent=5 // pred_fallthru
        _
      %p242 = scmp.le.s32.totalorder 1, %s18
      %p243 = scmp.lt.s32.totalorder %s18, 3
      %p244 = pnand %p242, %p243
      %p245 = pneg %p244
      // Predicated region
      $region37: #{prenorm_linear.1} parent=5 // pred_check
        _
      $region38: #{prenorm_linear.1} parent=5 // pred_check_branch
        %247 = sbr.rel (%p244) target = $region40
      $region39: #{prenorm_linear.1} parent=5 // pred_region
        %s248 = ssub.s32 %s18, 1
        %s249 = sand.u32 %s43, 1
        %s250 = scalar_lea.sflag [#allocation4], %s249
        %s251 = sand.u32 %s43, 1
        %s252 = smul.addr %s251, 8
        %s253 = scalar_lea.vmem [#allocation3], %s252
        // Predicated region
        $region41: #{prenorm_linear.1} parent=39 // pred_check
          %p254 = pneg %p56
        $region42: #{prenorm_linear.1} parent=39 // pred_check_branch
          %256 = sbr.rel (%p254) target = $region44
        $region43: #{prenorm_linear.1} parent=39 // pred_region
          %257 = dma.done %s250, 128
        $region44: #{prenorm_linear.1} parent=39 // pred_fallthru
          _
        // Predicated region
        $region45: #{prenorm_linear.1} parent=39 // pred_check
          %p258 = pneg %p124
        $region46: #{prenorm_linear.1} parent=39 // pred_check_branch
          %260 = sbr.rel (%p258) target = $region48
        $region47: #{prenorm_linear.1} parent=39 // pred_region
          %261 = dma.done [#allocation7], 512
        $region48: #{prenorm_linear.1} parent=39 // pred_fallthru
          _
        %s262 = sand.u32 %s43, 1
        %s263 = scalar_lea.sflag [#allocation4], %s262
        %s264 = sand.u32 %s43, 1
        %s265 = smul.addr %s264, 8
        %s266 = scalar_lea.vmem [#allocation3], %s265
        %p267 = pneg %p56
        %p268 = pneg %p53
        %p269 = pneg %p77
        %p270 = pneg %p74
        %p271 = pneg %p98
        %p272 = pneg %p95
        %p273 = pneg %p124
        %p274 = pneg %p121
        %p275 = scmp.lt.s32.totalorder %s28, 0
        %s276 = scalar_select %p275, %s28, 0
        %s277 = scalar_lea.vmem %s4, %s276
        %p278 = pneg %p150
        %p279 = pneg %p147
        %p280 = pneg %p178
        %p281 = pneg %p175
        %s282 = sand.u32 %s165, 1
        %s283 = scalar_lea.sflag [#allocation5], %s282
        %s284 = sand.u32 %s165, 1
        %s285 = smul.addr %s284, 8
        %s286 = scalar_lea.vmem [#allocation8], %s285
        %p287 = scmp.lt.s32.totalorder %s28, 0
        %s288 = scalar_select %p287, %s28, 0
        %s289 = scalar_lea.vmem %s4, %s288
        %p290 = scmp.eq.s32.totalorder %s28, 0
        // Predicated region
        $region49: #{prenorm_linear.1} parent=39 // pred_check
          %p291 = pneg %p290
        $region50: #{prenorm_linear.1} parent=39 // pred_check_branch
          %293 = sbr.rel (%p291) target = $region52
        $region51: #{prenorm_linear.1} parent=39 // pred_region
          %v294 = vld [vmem:[%s253] sm:$0xff]
          %vm295 = vcmask 261120
          %v296 = vsel %vm295, %v294, 0.0
          %297 = vadd.xlane.f32.xlu0 %v296
          %v298 = vpop.xlane.xlu0 %297
          %v299 = vmul.f32 %v298, 0.03125
          %v300 = vsub.f32 %v294, %v299
          %v301 = vmul.f32 %v300, %v300
          %v302 = vsel %vm295, %v301, 0.0
          %303 = vadd.xlane.f32.xlu0 %v302
          %v304 = vpop.xlane.xlu0 %303
          %v305 = vmul.f32 %v304, 0.03125
          %v306 = vadd.f32 %v305, 1e-05
          %v307 = vrsqrt.pop %v306
          %v308 = vmul.f32 %v300, %v307
          %v309 = vld [vmem:[%s1] sm:$0x1]
          %v311 = vlaneseq
          %v312 = vshrl.u32 %v311, 7
          %v313 = vsub.s32 0, %v312
          %v314 = vrot.slane %v309, %v313
          %v316 = vmul.f32 %v308, %v314
          %v317 = vld [vmem:[%s2] sm:$0x1]
          %v319 = vlaneseq
          %v320 = vshrl.u32 %v319, 7
          %v321 = vsub.s32 0, %v320
          %v322 = vrot.slane %v317, %v321
          %v324 = vadd.f32 %v316, %v322
          %325 = vst.msk [vmem:[#allocation2] sm:$0xff] %vm295, %v324
        $region52: #{prenorm_linear.1} parent=39 // pred_fallthru
          _
        %v326 = vld [vmem:[#allocation2] sm:$0xff]
        %v327 = vld [vmem:[#allocation6] sm:$0xff]
        %v328 = vld [vmem:[#allocation6 + $0x8] sm:$0xff]
        %v329 = vld [vmem:[#allocation6 + $0x10] sm:$0xff]
        %v330 = vld [vmem:[#allocation6 + $0x18] sm:$0xff]
        %v331 = vld [vmem:[%s289] sm:$0x1]
        %v333 = vlaneseq
        %v334 = vshrl.u32 %v333, 7
        %v335 = vsub.s32 0, %v334
        %v336 = vrot.slane %v331, %v335
        %vm338 = vcmask 261120
        %v340 = vsel %vm338, %v326, 0
        %342 = vmatprep.subr.mxu0 0.0
        %343 = vmatpush1.msra.mxu0 0.0
        %344 = vmatprep.subr.mxu0 0.0
        %345 = vmatpush1.msra.mxu0 0.0
        %346 = vmatprep.subr.mxu0 0.0
        %347 = vmatpush1.msra.mxu0 0.0
        %348 = vmatprep.subr.mxu0 0.0
        %349 = vmatpush1.msra.mxu0 0.0
        %350 = vmatprep.subr.mxu0 0.0
        %351 = vmatpush1.msra.mxu0 0.0
        %352 = vmatprep.subr.mxu0 0.0
        %353 = vmatpush1.msra.mxu0 0.0
        %354 = vmatprep.subr.mxu0 0.0
        %355 = vmatpush1.msra.mxu0 0.0
        %356 = vmatprep.subr.mxu0 0.0
        %357 = vmatpush1.msra.mxu0 0.0
        %358 = vmatprep.subr.mxu0 0.0
        %359 = vmatpush1.msra.mxu0 0.0
        %360 = vmatprep.subr.mxu0 0.0
        %361 = vmatpush1.msra.mxu0 0.0
        %362 = vmatprep.subr.mxu0 0.0
        %363 = vmatpush1.msra.mxu0 0.0
        %364 = vmatprep.subr.mxu0 0.0
        %365 = vmatpush1.msra.mxu0 0.0
        %366 = vmatprep.subr.mxu0 0.0
        %367 = vmatpush1.msra.mxu0 %v330
        %368 = vmatprep.subr.mxu0 0.0
        %369 = vmatpush1.msra.mxu0 %v329
        %370 = vmatprep.subr.mxu0 0.0
        %371 = vmatpush1.msra.mxu0 %v328
        %372 = vmatprep.subr.mxu0 0.0
        %373 = vmatpush1.msra.mxu0 %v327
        %374 = vmatprep.subr.mxu0 0.0
        %375 = vmatpush2.msra.mxu0 0.0
        %376 = vmatprep.subr.mxu0 0.0
        %377 = vmatpush2.msra.mxu0 0.0
        %378 = vmatprep.subr.mxu0 0.0
        %379 = vmatpush2.msra.mxu0 0.0
        %380 = vmatprep.subr.mxu0 0.0
        %381 = vmatpush2.msra.mxu0 0.0
        %382 = vmatprep.subr.mxu0 0.0
        %383 = vmatpush2.msra.mxu0 0.0
        %384 = vmatprep.subr.mxu0 0.0
        %385 = vmatpush2.msra.mxu0 0.0
        %386 = vmatprep.subr.mxu0 0.0
        %387 = vmatpush2.msra.mxu0 0.0
        %388 = vmatprep.subr.mxu0 0.0
        %389 = vmatpush2.msra.mxu0 0.0
        %390 = vmatprep.subr.mxu0 0.0
        %391 = vmatpush2.msra.mxu0 0.0
        %392 = vmatprep.subr.mxu0 0.0
        %393 = vmatpush2.msra.mxu0 0.0
        %394 = vmatprep.subr.mxu0 0.0
        %395 = vmatpush2.msra.mxu0 0.0
        %396 = vmatprep.subr.mxu0 0.0
        %397 = vmatpush2.msra.mxu0 0.0
        %398 = vmatprep.subr.mxu0 0.0
        %399 = vmatpush2.msra.mxu0 0.0
        %400 = vmatprep.subr.mxu0 0.0
        %401 = vmatpush2.msra.mxu0 0.0
        %402 = vmatprep.subr.mxu0 0.0
        %403 = vmatpush2.msra.mxu0 0.0
        %404 = vmatprep.subr.mxu0 0.0
        %405 = vmatpush2.msra.mxu0 0.0
        %406 = vmatprep.mubr.f32.mxu0 0.0
        %407 = vmatmul.mubr.f32.gmra.mxu0 %v340
        %v408 = vpop.f32.mrf.mxu0
        %v409 = vadd.f32 %v336, %v408
        %v410 = vpop.f32.mrf.mxu0
        %411 = vdwg.mxu0
        %412 = vst.msk [vmem:[%s286] sm:$0xff] %vm338, %v409
        %s413 = sand.u32 %s165, 1
        %s414 = scalar_lea.sflag [#allocation5], %s413
        %s415 = sand.u32 %s165, 1
        %s416 = smul.addr %s415, 8
        %s417 = scalar_lea.vmem [#allocation8], %s416
        // Predicated region
        $region53: #{prenorm_linear.1} parent=39 // pred_check
          %p418 = pneg %p175
        $region54: #{prenorm_linear.1} parent=39 // pred_check_branch
          %420 = sbr.rel (%p418) target = $region56
        $region55: #{prenorm_linear.1} parent=39 // pred_region
          %s422 = ssub.s32 128, 128
          %423 = vsyncadd %s414, %s422
          %s424 = sadd.s32 %s28, %s27
          %s425 = smul.addr %s424, 128
          %s426 = scalar_lea.hbm %s5, %s425
          %s428 = sshll.u32 %s417, 4
          %s429 = int_to_ptr.vmem [resolvable:$true] %s428
          %431 = dma.vmem_to_hbm [thread:$0]  %s429, 128, %s426, %s414
        $region56: #{prenorm_linear.1} parent=39 // pred_fallthru
          _
      $region40: #{prenorm_linear.1} parent=5 // pred_fallthru
        _
      %p432 = scmp.le.s32.totalorder 2, %s18
      // Predicated region
      $region57: #{prenorm_linear.1} parent=5 // pred_check
        %p433 = pneg %p432
      $region58: #{prenorm_linear.1} parent=5 // pred_check_branch
        %435 = sbr.rel (%p433) target = $region60
      $region59: #{prenorm_linear.1} parent=5 // pred_region
        %s436 = ssub.s32 %s18, 2
        // Predicated region
        $region61: #{prenorm_linear.1} parent=59 // pred_check
          %p437 = pneg %p181
        $region62: #{prenorm_linear.1} parent=59 // pred_check_branch
          %439 = sbr.rel (%p437) target = $region64
        $region63: #{prenorm_linear.1} parent=59 // pred_region
          %s440 = sand.u32 %s166, 1
          %s441 = scalar_lea.sflag [#allocation5], %s440
          %s442 = sand.u32 %s166, 1
          %s443 = smul.addr %s442, 8
          %s444 = scalar_lea.vmem [#allocation8], %s443
          %445 = dma.done %s441, 128
        $region64: #{prenorm_linear.1} parent=59 // pred_fallthru
          _
      $region60: #{prenorm_linear.1} parent=5 // pred_fallthru
        _
    $region6: #{prenorm_linear.1} parent=1 // loop_footer
      %s22 = sadd.s32 1, %s18
    $region7: #{prenorm_linear.1} parent=1 // loop_footer_branch
      %17 = sbr.rel target = $region3
    $region8: #{prenorm_linear.1} parent=1 // loop_exit
      _
    %446 = vsyncpa [#allocation4], 1
    %s447 = scalar_lea.sflag [#allocation4], 1
    %448 = vsyncpa %s447, 1
    %449 = vsyncpa [#allocation7], 1
    %450 = vsyncpa [#allocation5], 1
    %s451 = scalar_lea.sflag [#allocation5], 1
    %452 = vsyncpa %s451, 1

</llo_original>
